<compile_context>
chip_gen: v7x
topology: tpu7x:2x2x1
jax: 0.10.0
libtpu: 0.0.40
codegen_flags: <defaults>
</compile_context>

<pallas_src>
import math

import jax
import jax.numpy as jnp
from jax.experimental import pallas as pl
from jax.experimental.pallas import tpu as pltpu

MATMUL_DTYPE = jnp.bfloat16          # MXU-native on v5e/v6e/v7x
_INV_SQRT2 = 1.0 / math.sqrt(2.0)


# --------------------------------------------------------------- kernels ----
def _gelu_f32(h):
    # exact GELU (torch.nn.GELU default), elementwise math in f32
    return 0.5 * h * (1.0 + jax.lax.erf(h * _INV_SQRT2))


def _mlp_kernel(x_ref, w1_ref, b1_ref, w2_ref, b2_ref, o_ref):
    """Fused  y = GELU(x @ w1 + b1) @ w2 + b2  (whole H resident)."""
    h = jnp.dot(x_ref[...], w1_ref[...],
                preferred_element_type=jnp.float32) + b1_ref[...]
    h = _gelu_f32(h)
    y = jnp.dot(h.astype(w2_ref.dtype), w2_ref[...],
                preferred_element_type=jnp.float32) + b2_ref[...]
    o_ref[...] = y.astype(o_ref.dtype)


def _mlp_kernel_htiled(x_ref, w1_ref, b1_ref, w2_ref, b2_ref, o_ref, acc_ref):
    """H-tiled variant: grid=(row_tiles, h_tiles); reduction axis last."""
    k = pl.program_id(1)

    @pl.when(k == 0)
    def _():
        acc_ref[...] = jnp.zeros_like(acc_ref)

    h = jnp.dot(x_ref[...], w1_ref[...],
                preferred_element_type=jnp.float32) + b1_ref[...]
    h = _gelu_f32(h)
    acc_ref[...] += jnp.dot(h.astype(w2_ref.dtype), w2_ref[...],
                            preferred_element_type=jnp.float32)

    @pl.when(k == pl.num_programs(1) - 1)
    def _():
        o_ref[...] = (acc_ref[...] + b2_ref[...]).astype(o_ref.dtype)


# ----------------------------------------------------------------- helpers --
def _vmem_capacity_bytes():
    try:
        cap = getattr(pltpu.get_tpu_info(), "vmem_capacity_bytes", None)
        if cap:
            return int(cap)
    except Exception:
        pass
    return 64 * 1024 * 1024  # conservative fallback (v7x per-TC VMEM)


def _spec(shape, index_map, *, single_buffered=False):
    """BlockSpec; single_buffered=True for grid-invariant inputs."""
    if single_buffered:
        try:
            return pl.BlockSpec(shape, index_map, pipeline_mode=pl.Buffered(1))
        except TypeError:  # older BlockSpec without pipeline_mode kwarg
            pass
    return pl.BlockSpec(shape, index_map)


def _pick_block_h(H):
    for cand in (512, 256, 128):
        if H % cand == 0:
            return cand
    return H  # no clean 128-multiple divisor -> keep H whole


def _itemsize(dt):
    return jnp.dtype(dt).itemsize


# ----------------------------------------------------------------- wrapper --
def mlp_pallas(x, w1, b1, w2, b2, *, block_rows=512, force_path=None):
    """x: (..., in_features). Leading dims folded into one row axis."""
    *lead, D = x.shape
    rows = math.prod(lead) if lead else 1
    H = w1.shape[1]
    Dout = w2.shape[1]
    out_dtype = x.dtype

    # wrapper-side casts: halve streamed bytes, no per-tile VALU cast work
    x2 = x.reshape(rows, D).astype(MATMUL_DTYPE)
    w1m = w1.astype(MATMUL_DTYPE)
    w2m = w2.astype(MATMUL_DTYPE)
    b1f = b1.reshape(1, H).astype(jnp.float32)
    b2f = b2.reshape(1, Dout).astype(jnp.float32)

    mm_b = _itemsize(MATMUL_DTYPE)
    out_b = _itemsize(out_dtype)

    vmem_cap = _vmem_capacity_bytes()
    budget = int(0.8 * vmem_cap)                       # headroom for compiler
    vmem_limit = int(0.9 * vmem_cap)

    cost = pl.CostEstimate(
        flops=2 * rows * (D * H + H * Dout),
        transcendentals=rows * H,
        bytes_accessed=(rows * D * mm_b + D * H * mm_b + H * Dout * mm_b
                        + H * 4 + Dout * 4 + rows * Dout * out_b),
    )
    cparams = lambda sem: pltpu.CompilerParams(        # noqa: E731
        dimension_semantics=sem, vmem_limit_bytes=vmem_limit)

    br = min(block_rows, rows)
    weight_bytes = D * H * mm_b + H * 4 + H * Dout * mm_b + Dout * 4

    # footprints (x1.25 slack)
    single_need = int(1.25 * (weight_bytes + rows * D * mm_b
                              + rows * H * 4 + rows * Dout * 4))
    rowtiled_need = int(1.25 * (weight_bytes + 2 * br * D * mm_b
                                + 2 * br * Dout * out_b + br * H * 4))

    if force_path is not None:
        path = force_path
    elif rows <= block_rows and single_need <= budget:
        path = "single"
    elif rowtiled_need <= budget:
        path = "rows"
    else:
        path = "htiled"

    if path == "single":
        out = pl.pallas_call(
            _mlp_kernel,
            out_shape=jax.ShapeDtypeStruct((rows, Dout), out_dtype),
            in_specs=[pl.BlockSpec(memory_space=pltpu.MemorySpace.VMEM)] * 5,
            out_specs=pl.BlockSpec(memory_space=pltpu.MemorySpace.VMEM),
            compiler_params=pltpu.CompilerParams(vmem_limit_bytes=vmem_limit),
            cost_estimate=cost,
        )(x2, w1m, b1f, w2m, b2f)

    elif path == "rows":
        # Row-tiled: weights resident (single-buffered, DMA'd once), row tiles
        # stream through the auto-pipeline; row tiles independent -> parallel
        # (shards across the 2 TCs on v7x when grid length >= 2).
        grid = (pl.cdiv(rows, br),)
        out = pl.pallas_call(
            _mlp_kernel,
            out_shape=jax.ShapeDtypeStruct((rows, Dout), out_dtype),
            grid=grid,
            in_specs=[
                pl.BlockSpec((br, D), lambda i: (i, 0)),
                _spec((D, H), lambda i: (0, 0), single_buffered=True),
                _spec((1, H), lambda i: (0, 0), single_buffered=True),
                _spec((H, Dout), lambda i: (0, 0), single_buffered=True),
                _spec((1, Dout), lambda i: (0, 0), single_buffered=True),
            ],
            out_specs=pl.BlockSpec((br, Dout), lambda i: (i, 0)),
            compiler_params=cparams(("parallel",)),
            cost_estimate=cost,
        )(x2, w1m, b1f, w2m, b2f)

    else:  # "htiled": weights don't fit -> tile the hidden dim, accumulate fc2
        bh = _pick_block_h(H)
        grid = (pl.cdiv(rows, br), H // bh)
        out = pl.pallas_call(
            _mlp_kernel_htiled,
            out_shape=jax.ShapeDtypeStruct((rows, Dout), out_dtype),
            grid=grid,
            in_specs=[
                pl.BlockSpec((br, D), lambda i, k: (i, 0)),      # const over k
                pl.BlockSpec((D, bh), lambda i, k: (0, k)),
                pl.BlockSpec((1, bh), lambda i, k: (0, k)),
                pl.BlockSpec((bh, Dout), lambda i, k: (k, 0)),
                _spec((1, Dout), lambda i, k: (0, 0), single_buffered=True),
            ],
            out_specs=pl.BlockSpec((br, Dout), lambda i, k: (i, 0)),
            scratch_shapes=[pltpu.VMEM((br, Dout), jnp.float32)],
            compiler_params=cparams(("parallel", "arbitrary")),
            cost_estimate=cost,
        )(x2, w1m, b1f, w2m, b2f)

    return out.reshape(*lead, Dout)


# ------------------------------------------------------------- param init ---
def init_params(key, in_features, hidden_features, out_features):
    """PyTorch nn.Linear default init: U(-1/sqrt(fan_in), 1/sqrt(fan_in))."""
    k1, k2, k3, k4 = jax.random.split(key, 4)
    bound1 = 1.0 / math.sqrt(in_features)
    bound2 = 1.0 / math.sqrt(hidden_features)
    w1 = jax.random.uniform(k1, (in_features, hidden_features), jnp.float32,
                            -bound1, bound1)
    b1 = jax.random.uniform(k2, (hidden_features,), jnp.float32,
                            -bound1, bound1)
    w2 = jax.random.uniform(k3, (hidden_features, out_features), jnp.float32,
                            -bound2, bound2)
    b2 = jax.random.uniform(k4, (out_features,), jnp.float32,
                            -bound2, bound2)
    return w1, b1, w2, b2


# ---------------------------------------------------- pure-JAX reference ----
def mlp_reference(x, w1, b1, w2, b2):
    h = x @ w1 + b1
    h = 0.5 * h * (1.0 + jax.lax.erf(h / math.sqrt(2.0)))
    return h @ w2 + b2


# -------------------------------------------------------------------- main --
if __name__ == "__main__":
    # bf16 MXU operands vs f32 reference -> loose tolerance
    TOL = 2e-2 if MATMUL_DTYPE != jnp.float32 else 1e-3

    def _check(y, ref, shape):
        assert y.shape == shape, (y.shape, shape)
        err = float(jnp.max(jnp.abs(y.astype(jnp.float32) - ref)))
        assert jnp.allclose(y.astype(jnp.float32), ref, atol=TOL, rtol=TOL), err

    key = jax.random.PRNGKey(0)

    # ---- test 1: single-shot path (small rows, everything VMEM-resident) ----
    B, S, IN, HID, OUT = 2, 16, 128, 512, 128
    k1, k2, key = jax.random.split(key, 3)
    x = jax.random.normal(k1, (B, S, IN), jnp.float32)
    w1, b1, w2, b2 = init_params(k2, IN, HID, OUT)
    y = jax.block_until_ready(mlp_pallas(x, w1, b1, w2, b2))
    _check(y, mlp_reference(x, w1, b1, w2, b2), (B, S, OUT))

    # ---- test 2: row-tiled path (rows > block_rows, resident weights) -------
    B, S = 4, 256                                   # rows = 1024 -> 2 row tiles
    k1, key = jax.random.split(key)
    x = jax.random.normal(k1, (B, S, IN), jnp.float32)
    y = jax.block_until_ready(mlp_pallas(x, w1, b1, w2, b2, block_rows=512))
    _check(y, mlp_reference(x, w1, b1, w2, b2), (B, S, OUT))

    # ---- test 3: H-tiled accumulator path (forced; 2-step reduction) --------
    B, S, IN, HID, OUT = 2, 64, 256, 1024, 256
    k1, k2, key = jax.random.split(key, 3)
    x = jax.random.normal(k1, (B, S, IN), jnp.float32)
    w1, b1, w2, b2 = init_params(k2, IN, HID, OUT)
    y = jax.block_until_ready(
        mlp_pallas(x, w1, b1, w2, b2, force_path="htiled"))
    _check(y, mlp_reference(x, w1, b1, w2, b2), (B, S, OUT))

    print("KERNEL_OK")
</pallas_src>

<mosaic_0001>
module attributes {stable_mosaic.version = 11 : i64} {
  func.func @_mlp_kernel(%arg0: memref<32x128xbf16, #tpu.memory_space<vmem>>, %arg1: memref<128x512xbf16, #tpu.memory_space<vmem>>, %arg2: memref<1x512xf32, #tpu.memory_space<vmem>>, %arg3: memref<512x128xbf16, #tpu.memory_space<vmem>>, %arg4: memref<1x128xf32, #tpu.memory_space<vmem>>, %arg5: memref<32x128xf32, #tpu.memory_space<vmem>>) attributes {dimension_semantics = [], scalar_prefetch = 0 : i64, scratch_operands = 0 : i64, tpu.core_type = #tpu.core_type<tc>} {
    %c0 = arith.constant 0 : index
    %c0_0 = arith.constant 0 : index
    %0 = vector.load %arg0[%c0, %c0_0] : memref<32x128xbf16, #tpu.memory_space<vmem>>, vector<32x128xbf16>
    %c0_1 = arith.constant 0 : index
    %c0_2 = arith.constant 0 : index
    %1 = vector.load %arg1[%c0_1, %c0_2] : memref<128x512xbf16, #tpu.memory_space<vmem>>, vector<128x512xbf16>
    %cst = arith.constant dense<0.000000e+00> : vector<32x512xf32>
    %2 = tpu.matmul %0, %1, %cst {dimension_numbers = #tpu.dot_dimension_numbers<[1], [0], [0], [1], [0, 0, 1, 1], [], []>} : vector<32x128xbf16>, vector<128x512xbf16>, vector<32x512xf32> -> vector<32x512xf32>
    %c0_3 = arith.constant 0 : index
    %c0_4 = arith.constant 0 : index
    %3 = vector.load %arg2[%c0_3, %c0_4] : memref<1x512xf32, #tpu.memory_space<vmem>>, vector<1x512xf32>
    %4 = vector.broadcast %3 : vector<1x512xf32> to vector<32x512xf32>
    %5 = arith.addf %2, %4 : vector<32x512xf32>
    %cst_5 = arith.constant 5.000000e-01 : f32
    %6 = vector.broadcast %cst_5 : f32 to vector<32x512xf32>
    %7 = arith.mulf %6, %5 : vector<32x512xf32>
    %cst_6 = arith.constant 0.707106769 : f32
    %8 = vector.broadcast %cst_6 : f32 to vector<32x512xf32>
    %9 = arith.mulf %5, %8 : vector<32x512xf32>
    %10 = math.erf %9 : vector<32x512xf32>
    %cst_7 = arith.constant 1.000000e+00 : f32
    %11 = vector.broadcast %cst_7 : f32 to vector<32x512xf32>
    %12 = arith.addf %11, %10 : vector<32x512xf32>
    %13 = arith.mulf %7, %12 : vector<32x512xf32>
    %14 = arith.truncf %13 : vector<32x512xf32> to vector<32x512xbf16>
    %c0_8 = arith.constant 0 : index
    %c0_9 = arith.constant 0 : index
    %15 = vector.load %arg3[%c0_8, %c0_9] : memref<512x128xbf16, #tpu.memory_space<vmem>>, vector<512x128xbf16>
    %cst_10 = arith.constant dense<0.000000e+00> : vector<32x128xf32>
    %16 = tpu.matmul %14, %15, %cst_10 {dimension_numbers = #tpu.dot_dimension_numbers<[1], [0], [0], [1], [0, 0, 1, 1], [], []>} : vector<32x512xbf16>, vector<512x128xbf16>, vector<32x128xf32> -> vector<32x128xf32>
    %c0_11 = arith.constant 0 : index
    %c0_12 = arith.constant 0 : index
    %17 = vector.load %arg4[%c0_11, %c0_12] : memref<1x128xf32, #tpu.memory_space<vmem>>, vector<1x128xf32>
    %18 = vector.broadcast %17 : vector<1x128xf32> to vector<32x128xf32>
    %19 = arith.addf %16, %18 : vector<32x128xf32>
    %c0_13 = arith.constant 0 : index
    %c0_14 = arith.constant 0 : index
    %20 = vector.load %arg5[%c0_13, %c0_14] : memref<32x128xf32, #tpu.memory_space<vmem>>, vector<32x128xf32>
    tpu.vector_store %arg5[%c0_13, %c0_14], %19 {strides = array<i32>} : memref<32x128xf32, #tpu.memory_space<vmem>>, vector<32x128xf32>,
    return
  }
}

</mosaic_0001>

<llo_original>
// kernel: tpu_custom_call.1
$region0: #{tpu_custom_call.1}
  #allocation0 [shape = 'u32[]', space=smem, size = 0x4, offset = 0x4, fixed_abs, tag = 'smem constant byte address 0x4 - core index']
  #allocation1 [shape = 'u32[144,128]{1,0:T(1,128)}', space=vmem, size = 0x12000, scoped, tag = 'internal scratch']
  %s0 = inlined_call_operand.hbm [shape: bf16[32,128], index: 0, kind: input, shape index: {}]
  %s1 = inlined_call_operand.hbm [shape: bf16[128,512], index: 1, kind: input, shape index: {}]
  %s2 = inlined_call_operand.vmem [shape: f32[1,512], index: 2, kind: input, shape index: {}]
  %s3 = inlined_call_operand.hbm [shape: bf16[512,128], index: 3, kind: input, shape index: {}]
  %s4 = inlined_call_operand.vmem [shape: f32[1,128], index: 4, kind: input, shape index: {}]
  %s5 = inlined_call_operand.hbm [shape: f32[32,128], index: 5, kind: output, shape index: {}]
  %s6 = sld [smem:[#allocation0]]
  $region42: #{tpu_custom_call.1} parent=0
    _
  %s8 = ssub.s32 1, %s6
  %s9 = scalar_select 0, %s8, %s6
  $region1: #{tpu_custom_call.1} parent=0
    #allocation2 [shape = 'u8[8192]{0}', space=vmem, size = 0x2000, scoped, tag = 'input window, operand 0, single buffered']
    #allocation3 [shape = 's32[1]{0}', space=sflag, size = 0x4, scoped, tag = 'scoped memory for tpu_custom_call.1']
    #allocation4 [shape = 's32[1]{0}', space=sflag, size = 0x4, scoped, tag = 'scoped memory for tpu_custom_call.1']
    #allocation5 [shape = 'u8[131072]{0}', space=vmem, size = 0x20000, scoped, tag = 'input window, operand 1, single buffered']
    #allocation6 [shape = 's32[1]{0}', space=sflag, size = 0x4, scoped, tag = 'scoped memory for tpu_custom_call.1']
    #allocation7 [shape = 'u8[131072]{0}', space=vmem, size = 0x20000, scoped, tag = 'input window, operand 3, single buffered']
    #allocation8 [shape = 'u8[16384]{0}', space=vmem, size = 0x4000, scoped, tag = 'output window, operand 0, single buffered']
    %10 = vsyncpa [#allocation3], 0
    %11 = vsyncpa [#allocation6], 0
    %12 = vsyncpa [#allocation4], 0
    // Predicated region
    $region2: #{tpu_custom_call.1} parent=1 // pred_check
      _
    $region3: #{tpu_custom_call.1} parent=1 // pred_check_branch
      %14 = sbr.rel (0) target = $region5
    $region4: #{tpu_custom_call.1} parent=1 // pred_region
      %s16 = ssub.s32 256, 256
      %17 = vsyncadd [#allocation3], %s16
      %s18 = sshll.u32 [#allocation2], 4
      %s19 = int_to_ptr.vmem [resolvable:$true] %s18
      %24 = dma.hbm_to_vmem [thread:$0]  %s0, 256, %s19, [#allocation3], 64, 64, 4
    $region5: #{tpu_custom_call.1} parent=1 // pred_fallthru
      _
    // Predicated region
    $region6: #{tpu_custom_call.1} parent=1 // pred_check
      _
    $region7: #{tpu_custom_call.1} parent=1 // pred_check_branch
      %26 = sbr.rel (0) target = $region9
    $region8: #{tpu_custom_call.1} parent=1 // pred_region
      %s28 = ssub.s32 4096, 4096
      %29 = vsyncadd [#allocation6], %s28
      %s30 = sshll.u32 [#allocation5], 4
      %s31 = int_to_ptr.vmem [resolvable:$true] %s30
      %36 = dma.hbm_to_vmem [thread:$0]  %s1, 4096, %s31, [#allocation6], 256, 256, 16
    $region9: #{tpu_custom_call.1} parent=1 // pred_fallthru
      _
    // Predicated region
    $region10: #{tpu_custom_call.1} parent=1 // pred_check
      _
    $region11: #{tpu_custom_call.1} parent=1 // pred_check_branch
      %38 = sbr.rel (0) target = $region13
    $region12: #{tpu_custom_call.1} parent=1 // pred_region
      _
    $region13: #{tpu_custom_call.1} parent=1 // pred_fallthru
      _
    // Predicated region
    $region14: #{tpu_custom_call.1} parent=1 // pred_check
      _
    $region15: #{tpu_custom_call.1} parent=1 // pred_check_branch
      %40 = sbr.rel (0) target = $region17
    $region16: #{tpu_custom_call.1} parent=1 // pred_region
      %s42 = ssub.s32 4096, 4096
      %43 = vsyncadd [#allocation6], %s42
      %s44 = sshll.u32 [#allocation7], 4
      %s45 = int_to_ptr.vmem [resolvable:$true] %s44
      %50 = dma.hbm_to_vmem [thread:$0]  %s3, 4096, %s45, [#allocation6], 64, 64, 4
    $region17: #{tpu_custom_call.1} parent=1 // pred_fallthru
      _
    // Predicated region
    $region18: #{tpu_custom_call.1} parent=1 // pred_check
      _
    $region19: #{tpu_custom_call.1} parent=1 // pred_check_branch
      %52 = sbr.rel (0) target = $region21
    $region20: #{tpu_custom_call.1} parent=1 // pred_region
      _
    $region21: #{tpu_custom_call.1} parent=1 // pred_fallthru
      _
    // Predicated region
    $region22: #{tpu_custom_call.1} parent=1 // pred_check
      _
    $region23: #{tpu_custom_call.1} parent=1 // pred_check_branch
      %54 = sbr.rel (0) target = $region25
    $region24: #{tpu_custom_call.1} parent=1 // pred_region
      %55 = dma.done [#allocation3], 256
    $region25: #{tpu_custom_call.1} parent=1 // pred_fallthru
      _
    // Predicated region
    $region26: #{tpu_custom_call.1} parent=1 // pred_check
      _
    $region27: #{tpu_custom_call.1} parent=1 // pred_check_branch
      %57 = sbr.rel (0) target = $region29
    $region28: #{tpu_custom_call.1} parent=1 // pred_region
      %58 = dma.done [#allocation6], 4096
    $region29: #{tpu_custom_call.1} parent=1 // pred_fallthru
      _
    // Predicated region
    $region30: #{tpu_custom_call.1} parent=1 // pred_check
      _
    $region31: #{tpu_custom_call.1} parent=1 // pred_check_branch
      %60 = sbr.rel (0) target = $region33
    $region32: #{tpu_custom_call.1} parent=1 // pred_region
      %61 = dma.done [#allocation6], 4096
    $region33: #{tpu_custom_call.1} parent=1 // pred_fallthru
      _
    %v63 = vld [vmem:[#allocation2] sm:$0xf]
    %v64 = vld [vmem:[#allocation2 + $0x4] sm:$0xf]
    %v65 = vld [vmem:[#allocation2 + $0x8] sm:$0xf]
    %v66 = vld [vmem:[#allocation2 + $0xc] sm:$0xf]
    %v67 = vld [vmem:[#allocation5] sm:$0xff]
    %v68 = vld [vmem:[#allocation5 + $0x8] sm:$0xff]
    %v69 = vld [vmem:[#allocation5 + $0x10] sm:$0xff]
    %v70 = vld [vmem:[#allocation5 + $0x18] sm:$0xff]
    %v71 = vld [vmem:[#allocation5 + $0x20] sm:$0xff]
    %v72 = vld [vmem:[#allocation5 + $0x28] sm:$0xff]
    %v73 = vld [vmem:[#allocation5 + $0x30] sm:$0xff]
    %v74 = vld [vmem:[#allocation5 + $0x38] sm:$0xff]
    %v75 = vld [vmem:[#allocation5 + $0x40] sm:$0xff]
    %v76 = vld [vmem:[#allocation5 + $0x48] sm:$0xff]
    %v77 = vld [vmem:[#allocation5 + $0x50] sm:$0xff]
    %v78 = vld [vmem:[#allocation5 + $0x58] sm:$0xff]
    %v79 = vld [vmem:[#allocation5 + $0x60] sm:$0xff]
    %v80 = vld [vmem:[#allocation5 + $0x68] sm:$0xff]
    %v81 = vld [vmem:[#allocation5 + $0x70] sm:$0xff]
    %v82 = vld [vmem:[#allocation5 + $0x78] sm:$0xff]
    %v83 = vld [vmem:[#allocation5 + $0x80] sm:$0xff]
    %v84 = vld [vmem:[#allocation5 + $0x88] sm:$0xff]
    %v85 = vld [vmem:[#allocation5 + $0x90] sm:$0xff]
    %v86 = vld [vmem:[#allocation5 + $0x98] sm:$0xff]
    %v87 = vld [vmem:[#allocation5 + $0xa0] sm:$0xff]
    %v88 = vld [vmem:[#allocation5 + $0xa8] sm:$0xff]
    %v89 = vld [vmem:[#allocation5 + $0xb0] sm:$0xff]
    %v90 = vld [vmem:[#allocation5 + $0xb8] sm:$0xff]
    %v91 = vld [vmem:[#allocation5 + $0xc0] sm:$0xff]
    %v92 = vld [vmem:[#allocation5 + $0xc8] sm:$0xff]
    %v93 = vld [vmem:[#allocation5 + $0xd0] sm:$0xff]
    %v94 = vld [vmem:[#allocation5 + $0xd8] sm:$0xff]
    %v95 = vld [vmem:[#allocation5 + $0xe0] sm:$0xff]
    %v96 = vld [vmem:[#allocation5 + $0xe8] sm:$0xff]
    %v97 = vld [vmem:[#allocation5 + $0xf0] sm:$0xff]
    %v98 = vld [vmem:[#allocation5 + $0xf8] sm:$0xff]
    %v99 = vld [vmem:[%s2] sm:$0xf]
    %v101 = vlaneseq
    %v102 = vshrl.u32 %v101, 7
    %v103 = vsub.s32 0, %v102
    %v104 = vrot.slane %v99, %v103
    %v105 = vlaneseq
    %v106 = vshrl.u32 %v105, 7
    %v107 = vsub.s32 1, %v106
    %v108 = vrot.slane %v99, %v107
    %v109 = vlaneseq
    %v110 = vshrl.u32 %v109, 7
    %v111 = vsub.s32 2, %v110
    %v112 = vrot.slane %v99, %v111
    %v113 = vlaneseq
    %v114 = vshrl.u32 %v113, 7
    %v115 = vsub.s32 3, %v114
    %v116 = vrot.slane %v99, %v115
    %v125 = vunpack.c.l.b16 %v63
    %v126 = vunpack.c.l.b16 %v64
    %v127 = vunpack.c.l.b16 %v65
    %v128 = vunpack.c.l.b16 %v66
    %v129 = vpack.c.b16 %v126, %v125
    %v130 = vpack.c.b16 %v128, %v127
    %v165 = vunpack.c.l.b16 %v67
    %v166 = vunpack.c.h.b16 %v67
    %v167 = vunpack.c.l.b16 %v68
    %v168 = vunpack.c.h.b16 %v68
    %v169 = vunpack.c.l.b16 %v69
    %v170 = vunpack.c.h.b16 %v69
    %v171 = vunpack.c.l.b16 %v70
    %v172 = vunpack.c.h.b16 %v70
    %v173 = vunpack.c.l.b16 %v71
    %v174 = vunpack.c.h.b16 %v71
    %v175 = vunpack.c.l.b16 %v72
    %v176 = vunpack.c.h.b16 %v72
    %v177 = vunpack.c.l.b16 %v73
    %v178 = vunpack.c.h.b16 %v73
    %v179 = vunpack.c.l.b16 %v74
    %v180 = vunpack.c.h.b16 %v74
    %v181 = vunpack.c.l.b16 %v75
    %v182 = vunpack.c.h.b16 %v75
    %v183 = vunpack.c.l.b16 %v76
    %v184 = vunpack.c.h.b16 %v76
    %v185 = vunpack.c.l.b16 %v77
    %v186 = vunpack.c.h.b16 %v77
    %v187 = vunpack.c.l.b16 %v78
    %v188 = vunpack.c.h.b16 %v78
    %v189 = vunpack.c.l.b16 %v79
    %v190 = vunpack.c.h.b16 %v79
    %v191 = vunpack.c.l.b16 %v80
    %v192 = vunpack.c.h.b16 %v80
    %v193 = vunpack.c.l.b16 %v81
    %v194 = vunpack.c.h.b16 %v81
    %v195 = vunpack.c.l.b16 %v82
    %v196 = vunpack.c.h.b16 %v82
    %v197 = vunpack.c.l.b16 %v83
    %v198 = vunpack.c.h.b16 %v83
    %v199 = vunpack.c.l.b16 %v84
    %v200 = vunpack.c.h.b16 %v84
    %v201 = vunpack.c.l.b16 %v85
    %v202 = vunpack.c.h.b16 %v85
    %v203 = vunpack.c.l.b16 %v86
    %v204 = vunpack.c.h.b16 %v86
    %v205 = vunpack.c.l.b16 %v87
    %v206 = vunpack.c.h.b16 %v87
    %v207 = vunpack.c.l.b16 %v88
    %v208 = vunpack.c.h.b16 %v88
    %v209 = vunpack.c.l.b16 %v89
    %v210 = vunpack.c.h.b16 %v89
    %v211 = vunpack.c.l.b16 %v90
    %v212 = vunpack.c.h.b16 %v90
    %v213 = vunpack.c.l.b16 %v91
    %v214 = vunpack.c.h.b16 %v91
    %v215 = vunpack.c.l.b16 %v92
    %v216 = vunpack.c.h.b16 %v92
    %v217 = vunpack.c.l.b16 %v93
    %v218 = vunpack.c.h.b16 %v93
    %v219 = vunpack.c.l.b16 %v94
    %v220 = vunpack.c.h.b16 %v94
    %v221 = vunpack.c.l.b16 %v95
    %v222 = vunpack.c.h.b16 %v95
    %v223 = vunpack.c.l.b16 %v96
    %v224 = vunpack.c.h.b16 %v96
    %v225 = vunpack.c.l.b16 %v97
    %v226 = vunpack.c.h.b16 %v97
    %v227 = vunpack.c.l.b16 %v98
    %v228 = vunpack.c.h.b16 %v98
    %v229 = vpack.c.b16 %v169, %v165
    %v230 = vpack.c.b16 %v170, %v166
    %v231 = vpack.c.b16 %v171, %v167
    %v232 = vpack.c.b16 %v172, %v168
    %v233 = vpack.c.b16 %v177, %v173
    %v234 = vpack.c.b16 %v178, %v174
    %v235 = vpack.c.b16 %v179, %v175
    %v236 = vpack.c.b16 %v180, %v176
    %v237 = vpack.c.b16 %v185, %v181
    %v238 = vpack.c.b16 %v186, %v182
    %v239 = vpack.c.b16 %v187, %v183
    %v240 = vpack.c.b16 %v188, %v184
    %v241 = vpack.c.b16 %v193, %v189
    %v242 = vpack.c.b16 %v194, %v190
    %v243 = vpack.c.b16 %v195, %v191
    %v244 = vpack.c.b16 %v196, %v192
    %v245 = vpack.c.b16 %v201, %v197
    %v246 = vpack.c.b16 %v202, %v198
    %v247 = vpack.c.b16 %v203, %v199
    %v248 = vpack.c.b16 %v204, %v200
    %v249 = vpack.c.b16 %v209, %v205
    %v250 = vpack.c.b16 %v210, %v206
    %v251 = vpack.c.b16 %v211, %v207
    %v252 = vpack.c.b16 %v212, %v208
    %v253 = vpack.c.b16 %v217, %v213
    %v254 = vpack.c.b16 %v218, %v214
    %v255 = vpack.c.b16 %v219, %v215
    %v256 = vpack.c.b16 %v220, %v216
    %v257 = vpack.c.b16 %v225, %v221
    %v258 = vpack.c.b16 %v226, %v222
    %v259 = vpack.c.b16 %v227, %v223
    %v260 = vpack.c.b16 %v228, %v224
    %293 = vmatprep.subr.bf16.mxu0 %v230
    %294 = vmatpush1.bf16.msra.mxu0 %v229
    %295 = vmatprep.subr.bf16.mxu0 %v234
    %296 = vmatpush1.bf16.msra.mxu0 %v233
    %297 = vmatprep.subr.bf16.mxu0 %v238
    %298 = vmatpush1.bf16.msra.mxu0 %v237
    %299 = vmatprep.subr.bf16.mxu0 %v242
    %300 = vmatpush1.bf16.msra.mxu0 %v241
    %301 = vmatprep.subr.bf16.mxu0 %v246
    %302 = vmatpush1.bf16.msra.mxu0 %v245
    %303 = vmatprep.subr.bf16.mxu0 %v250
    %304 = vmatpush1.bf16.msra.mxu0 %v249
    %305 = vmatprep.subr.bf16.mxu0 %v254
    %306 = vmatpush1.bf16.msra.mxu0 %v253
    %307 = vmatprep.subr.bf16.mxu0 %v258
    %308 = vmatpush1.bf16.msra.mxu0 %v257
    %309 = vmatprep.subr.bf16.mxu0 0
    %310 = vmatpush1.bf16.msra.mxu0 0
    %311 = vmatprep.subr.bf16.mxu0 0
    %312 = vmatpush1.bf16.msra.mxu0 0
    %313 = vmatprep.subr.bf16.mxu0 0
    %314 = vmatpush1.bf16.msra.mxu0 0
    %315 = vmatprep.subr.bf16.mxu0 0
    %316 = vmatpush1.bf16.msra.mxu0 0
    %317 = vmatprep.subr.bf16.mxu0 0
    %318 = vmatpush1.bf16.msra.mxu0 0
    %319 = vmatprep.subr.bf16.mxu0 0
    %320 = vmatpush1.bf16.msra.mxu0 0
    %321 = vmatprep.subr.bf16.mxu0 0
    %322 = vmatpush1.bf16.msra.mxu0 0
    %323 = vmatprep.subr.bf16.mxu0 0
    %324 = vmatpush1.bf16.msra.mxu0 0
    %325 = vmatprep.mubr.bf16.mxu0 0
    %326 = vmatmul.mubr.bf16.gmra.mrb[0].mxu0 %v129
    %v327 = vpop.f32.mrb[0].mxu0
    %v328 = vadd.f32 %v104, %v327
    %v329 = vpop.f32.mrb[0].mxu0
    %v330 = vadd.f32 %v108, %v329
    %v331 = vpop.f32.mrb[0].mxu0
    %v332 = vadd.f32 %v104, %v331
    %v333 = vpop.f32.mrb[0].mxu0
    %v334 = vadd.f32 %v108, %v333
    %335 = vmatprep.mubr.bf16.mxu0 0
    %336 = vmatmul.mubr.bf16.gmra.mrb[0].mxu0 %v130
    %v337 = vpop.f32.mrb[0].mxu0
    %v338 = vadd.f32 %v104, %v337
    %v339 = vpop.f32.mrb[0].mxu0
    %v340 = vadd.f32 %v108, %v339
    %v341 = vpop.f32.mrb[0].mxu0
    %v342 = vadd.f32 %v104, %v341
    %v343 = vpop.f32.mrb[0].mxu0
    %v344 = vadd.f32 %v108, %v343
    %345 = vdwg.mxu0
    %346 = vmatprep.subr.bf16.mxu0 %v232
    %347 = vmatpush1.bf16.msra.mxu0 %v231
    %348 = vmatprep.subr.bf16.mxu0 %v236
    %349 = vmatpush1.bf16.msra.mxu0 %v235
    %350 = vmatprep.subr.bf16.mxu0 %v240
    %351 = vmatpush1.bf16.msra.mxu0 %v239
    %352 = vmatprep.subr.bf16.mxu0 %v244
    %353 = vmatpush1.bf16.msra.mxu0 %v243
    %354 = vmatprep.subr.bf16.mxu0 %v248
    %355 = vmatpush1.bf16.msra.mxu0 %v247
    %356 = vmatprep.subr.bf16.mxu0 %v252
    %357 = vmatpush1.bf16.msra.mxu0 %v251
    %358 = vmatprep.subr.bf16.mxu0 %v256
    %359 = vmatpush1.bf16.msra.mxu0 %v255
    %360 = vmatprep.subr.bf16.mxu0 %v260
    %361 = vmatpush1.bf16.msra.mxu0 %v259
    %362 = vmatprep.subr.bf16.mxu0 0
    %363 = vmatpush1.bf16.msra.mxu0 0
    %364 = vmatprep.subr.bf16.mxu0 0
    %365 = vmatpush1.bf16.msra.mxu0 0
    %366 = vmatprep.subr.bf16.mxu0 0
    %367 = vmatpush1.bf16.msra.mxu0 0
    %368 = vmatprep.subr.bf16.mxu0 0
    %369 = vmatpush1.bf16.msra.mxu0 0
    %370 = vmatprep.subr.bf16.mxu0 0
    %371 = vmatpush1.bf16.msra.mxu0 0
    %372 = vmatprep.subr.bf16.mxu0 0
    %373 = vmatpush1.bf16.msra.mxu0 0
    %374 = vmatprep.subr.bf16.mxu0 0
    %375 = vmatpush1.bf16.msra.mxu0 0
    %376 = vmatprep.subr.bf16.mxu0 0
    %377 = vmatpush1.bf16.msra.mxu0 0
    %378 = vmatprep.mubr.bf16.mxu0 0
    %379 = vmatmul.mubr.bf16.gmra.mrb[0].mxu0 %v129
    %v380 = vpop.f32.mrb[0].mxu0
    %v381 = vadd.f32 %v112, %v380
    %v382 = vpop.f32.mrb[0].mxu0
    %v383 = vadd.f32 %v116, %v382
    %v384 = vpop.f32.mrb[0].mxu0
    %v385 = vadd.f32 %v112, %v384
    %v386 = vpop.f32.mrb[0].mxu0
    %v387 = vadd.f32 %v116, %v386
    %388 = vmatprep.mubr.bf16.mxu0 0
    %389 = vmatmul.mubr.bf16.gmra.mrb[0].mxu0 %v130
    %v390 = vpop.f32.mrb[0].mxu0
    %v391 = vadd.f32 %v112, %v390
    %v392 = vpop.f32.mrb[0].mxu0
    %v393 = vadd.f32 %v116, %v392
    %v394 = vpop.f32.mrb[0].mxu0
    %v395 = vadd.f32 %v112, %v394
    %v396 = vpop.f32.mrb[0].mxu0
    %v397 = vadd.f32 %v116, %v396
    %398 = vdwg.mxu0
    %v399 = vmul.f32 %v328, 0.5
    %v400 = vmul.f32 %v330, 0.5
    %v401 = vmul.f32 %v381, 0.5
    %v402 = vmul.f32 %v383, 0.5
    %v403 = vmul.f32 %v332, 0.5
    %v404 = vmul.f32 %v334, 0.5
    %v405 = vmul.f32 %v385, 0.5
    %v406 = vmul.f32 %v387, 0.5
    %v407 = vmul.f32 %v338, 0.5
    %v408 = vmul.f32 %v340, 0.5
    %v409 = vmul.f32 %v391, 0.5
    %v410 = vmul.f32 %v393, 0.5
    %v411 = vmul.f32 %v342, 0.5
    %v412 = vmul.f32 %v344, 0.5
    %v413 = vmul.f32 %v395, 0.5
    %v414 = vmul.f32 %v397, 0.5
    %v415 = vmul.f32 %v328, 0.70710677
    %v416 = vmul.f32 %v330, 0.70710677
    %v417 = vmul.f32 %v381, 0.70710677
    %v418 = vmul.f32 %v383, 0.70710677
    %v419 = vmul.f32 %v332, 0.70710677
    %v420 = vmul.f32 %v334, 0.70710677
    %v421 = vmul.f32 %v385, 0.70710677
    %v422 = vmul.f32 %v387, 0.70710677
    %v423 = vmul.f32 %v338, 0.70710677
    %v424 = vmul.f32 %v340, 0.70710677
    %v425 = vmul.f32 %v391, 0.70710677
    %v426 = vmul.f32 %v393, 0.70710677
    %v427 = vmul.f32 %v342, 0.70710677
    %v428 = vmul.f32 %v344, 0.70710677
    %v429 = vmul.f32 %v395, 0.70710677
    %v430 = vmul.f32 %v397, 0.70710677
    %v431 = verf.f32.pop %v415
    %v432 = verf.f32.pop %v416
    %v433 = verf.f32.pop %v417
    %v434 = verf.f32.pop %v418
    %v435 = verf.f32.pop %v419
    %v436 = verf.f32.pop %v420
    %v437 = verf.f32.pop %v421
    %v438 = verf.f32.pop %v422
    %v439 = verf.f32.pop %v423
    %v440 = verf.f32.pop %v424
    %v441 = verf.f32.pop %v425
    %v442 = verf.f32.pop %v426
    %v443 = verf.f32.pop %v427
    %v444 = verf.f32.pop %v428
    %v445 = verf.f32.pop %v429
    %v446 = verf.f32.pop %v430
    %v447 = vadd.f32 %v431, 1.0
    %v448 = vadd.f32 %v432, 1.0
    %v449 = vadd.f32 %v433, 1.0
    %v450 = vadd.f32 %v434, 1.0
    %v451 = vadd.f32 %v435, 1.0
    %v452 = vadd.f32 %v436, 1.0
    %v453 = vadd.f32 %v437, 1.0
    %v454 = vadd.f32 %v438, 1.0
    %v455 = vadd.f32 %v439, 1.0
    %v456 = vadd.f32 %v440, 1.0
    %v457 = vadd.f32 %v441, 1.0
    %v458 = vadd.f32 %v442, 1.0
    %v459 = vadd.f32 %v443, 1.0
    %v460 = vadd.f32 %v444, 1.0
    %v461 = vadd.f32 %v445, 1.0
    %v462 = vadd.f32 %v446, 1.0
    %v463 = vmul.f32 %v399, %v447
    %v464 = vmul.f32 %v400, %v448
    %v465 = vmul.f32 %v401, %v449
    %v466 = vmul.f32 %v402, %v450
    %v467 = vmul.f32 %v403, %v451
    %v468 = vmul.f32 %v404, %v452
    %v469 = vmul.f32 %v405, %v453
    %v470 = vmul.f32 %v406, %v454
    %v471 = vmul.f32 %v407, %v455
    %v472 = vmul.f32 %v408, %v456
    %v473 = vmul.f32 %v409, %v457
    %v474 = vmul.f32 %v410, %v458
    %v475 = vmul.f32 %v411, %v459
    %v476 = vmul.f32 %v412, %v460
    %v477 = vmul.f32 %v413, %v461
    %v478 = vmul.f32 %v414, %v462
    %v479 = vpack.c.bf16 %v467, %v463
    %v480 = vpack.c.bf16 %v468, %v464
    %v481 = vpack.c.bf16 %v469, %v465
    %v482 = vpack.c.bf16 %v470, %v466
    %v483 = vpack.c.bf16 %v475, %v471
    %v484 = vpack.c.bf16 %v476, %v472
    %v485 = vpack.c.bf16 %v477, %v473
    %v486 = vpack.c.bf16 %v478, %v474
    %v487 = vld [vmem:[#allocation7] sm:$0xf]
    %v488 = vld [vmem:[#allocation7 + $0x4] sm:$0xf]
    %v489 = vld [vmem:[#allocation7 + $0x8] sm:$0xf]
    %v490 = vld [vmem:[#allocation7 + $0xc] sm:$0xf]
    %v491 = vld [vmem:[#allocation7 + $0x10] sm:$0xf]
    %v492 = vld [vmem:[#allocation7 + $0x14] sm:$0xf]
    %v493 = vld [vmem:[#allocation7 + $0x18] sm:$0xf]
    %v494 = vld [vmem:[#allocation7 + $0x1c] sm:$0xf]
    %v495 = vld [vmem:[#allocation7 + $0x20] sm:$0xf]
    %v496 = vld [vmem:[#allocation7 + $0x24] sm:$0xf]
    %v497 = vld [vmem:[#allocation7 + $0x28] sm:$0xf]
    %v498 = vld [vmem:[#allocation7 + $0x2c] sm:$0xf]
    %v499 = vld [vmem:[#allocation7 + $0x30] sm:$0xf]
    %v500 = vld [vmem:[#allocation7 + $0x34] sm:$0xf]
    %v501 = vld [vmem:[#allocation7 + $0x38] sm:$0xf]
    %v502 = vld [vmem:[#allocation7 + $0x3c] sm:$0xf]
    %v503 = vld [vmem:[#allocation7 + $0x40] sm:$0xf]
    %v504 = vld [vmem:[#allocation7 + $0x44] sm:$0xf]
    %v505 = vld [vmem:[#allocation7 + $0x48] sm:$0xf]
    %v506 = vld [vmem:[#allocation7 + $0x4c] sm:$0xf]
    %v507 = vld [vmem:[#allocation7 + $0x50] sm:$0xf]
    %v508 = vld [vmem:[#allocation7 + $0x54] sm:$0xf]
    %v509 = vld [vmem:[#allocation7 + $0x58] sm:$0xf]
    %v510 = vld [vmem:[#allocation7 + $0x5c] sm:$0xf]
    %v511 = vld [vmem:[#allocation7 + $0x60] sm:$0xf]
    %v512 = vld [vmem:[#allocation7 + $0x64] sm:$0xf]
    %v513 = vld [vmem:[#allocation7 + $0x68] sm:$0xf]
    %v514 = vld [vmem:[#allocation7 + $0x6c] sm:$0xf]
    %v515 = vld [vmem:[#allocation7 + $0x70] sm:$0xf]
    %v516 = vld [vmem:[#allocation7 + $0x74] sm:$0xf]
    %v517 = vld [vmem:[#allocation7 + $0x78] sm:$0xf]
    %v518 = vld [vmem:[#allocation7 + $0x7c] sm:$0xf]
    %v519 = vld [vmem:[#allocation7 + $0x80] sm:$0xf]
    %v520 = vld [vmem:[#allocation7 + $0x84] sm:$0xf]
    %v521 = vld [vmem:[#allocation7 + $0x88] sm:$0xf]
    %v522 = vld [vmem:[#allocation7 + $0x8c] sm:$0xf]
    %v523 = vld [vmem:[#allocation7 + $0x90] sm:$0xf]
    %v524 = vld [vmem:[#allocation7 + $0x94] sm:$0xf]
    %v525 = vld [vmem:[#allocation7 + $0x98] sm:$0xf]
    %v526 = vld [vmem:[#allocation7 + $0x9c] sm:$0xf]
    %v527 = vld [vmem:[#allocation7 + $0xa0] sm:$0xf]
    %v528 = vld [vmem:[#allocation7 + $0xa4] sm:$0xf]
    %v529 = vld [vmem:[#allocation7 + $0xa8] sm:$0xf]
    %v530 = vld [vmem:[#allocation7 + $0xac] sm:$0xf]
    %v531 = vld [vmem:[#allocation7 + $0xb0] sm:$0xf]
    %v532 = vld [vmem:[#allocation7 + $0xb4] sm:$0xf]
    %v533 = vld [vmem:[#allocation7 + $0xb8] sm:$0xf]
    %v534 = vld [vmem:[#allocation7 + $0xbc] sm:$0xf]
    %v535 = vld [vmem:[#allocation7 + $0xc0] sm:$0xf]
    %v536 = vld [vmem:[#allocation7 + $0xc4] sm:$0xf]
    %v537 = vld [vmem:[#allocation7 + $0xc8] sm:$0xf]
    %v538 = vld [vmem:[#allocation7 + $0xcc] sm:$0xf]
    %v539 = vld [vmem:[#allocation7 + $0xd0] sm:$0xf]
    %v540 = vld [vmem:[#allocation7 + $0xd4] sm:$0xf]
    %v541 = vld [vmem:[#allocation7 + $0xd8] sm:$0xf]
    %v542 = vld [vmem:[#allocation7 + $0xdc] sm:$0xf]
    %v543 = vld [vmem:[#allocation7 + $0xe0] sm:$0xf]
    %v544 = vld [vmem:[#allocation7 + $0xe4] sm:$0xf]
    %v545 = vld [vmem:[#allocation7 + $0xe8] sm:$0xf]
    %v546 = vld [vmem:[#allocation7 + $0xec] sm:$0xf]
    %v547 = vld [vmem:[#allocation7 + $0xf0] sm:$0xf]
    %v548 = vld [vmem:[#allocation7 + $0xf4] sm:$0xf]
    %v549 = vld [vmem:[#allocation7 + $0xf8] sm:$0xf]
    %v550 = vld [vmem:[#allocation7 + $0xfc] sm:$0xf]
    %v551 = vld [vmem:[%s4] sm:$0x1]
    %v553 = vlaneseq
    %v554 = vshrl.u32 %v553, 7
    %v555 = vsub.s32 0, %v554
    %v556 = vrot.slane %v551, %v555
    %v622 = vunpack.c.l.b16 %v487
    %v623 = vunpack.c.l.b16 %v488
    %v624 = vunpack.c.l.b16 %v489
    %v625 = vunpack.c.l.b16 %v490
    %v626 = vunpack.c.l.b16 %v491
    %v627 = vunpack.c.l.b16 %v492
    %v628 = vunpack.c.l.b16 %v493
    %v629 = vunpack.c.l.b16 %v494
    %v630 = vunpack.c.l.b16 %v495
    %v631 = vunpack.c.l.b16 %v496
    %v632 = vunpack.c.l.b16 %v497
    %v633 = vunpack.c.l.b16 %v498
    %v634 = vunpack.c.l.b16 %v499
    %v635 = vunpack.c.l.b16 %v500
    %v636 = vunpack.c.l.b16 %v501
    %v637 = vunpack.c.l.b16 %v502
    %v638 = vunpack.c.l.b16 %v503
    %v639 = vunpack.c.l.b16 %v504
    %v640 = vunpack.c.l.b16 %v505
    %v641 = vunpack.c.l.b16 %v506
    %v642 = vunpack.c.l.b16 %v507
    %v643 = vunpack.c.l.b16 %v508
    %v644 = vunpack.c.l.b16 %v509
    %v645 = vunpack.c.l.b16 %v510
    %v646 = vunpack.c.l.b16 %v511
    %v647 = vunpack.c.l.b16 %v512
    %v648 = vunpack.c.l.b16 %v513
    %v649 = vunpack.c.l.b16 %v514
    %v650 = vunpack.c.l.b16 %v515
    %v651 = vunpack.c.l.b16 %v516
    %v652 = vunpack.c.l.b16 %v517
    %v653 = vunpack.c.l.b16 %v518
    %v654 = vunpack.c.l.b16 %v519
    %v655 = vunpack.c.l.b16 %v520
    %v656 = vunpack.c.l.b16 %v521
    %v657 = vunpack.c.l.b16 %v522
    %v658 = vunpack.c.l.b16 %v523
    %v659 = vunpack.c.l.b16 %v524
    %v660 = vunpack.c.l.b16 %v525
    %v661 = vunpack.c.l.b16 %v526
    %v662 = vunpack.c.l.b16 %v527
    %v663 = vunpack.c.l.b16 %v528
    %v664 = vunpack.c.l.b16 %v529
    %v665 = vunpack.c.l.b16 %v530
    %v666 = vunpack.c.l.b16 %v531
    %v667 = vunpack.c.l.b16 %v532
    %v668 = vunpack.c.l.b16 %v533
    %v669 = vunpack.c.l.b16 %v534
    %v670 = vunpack.c.l.b16 %v535
    %v671 = vunpack.c.l.b16 %v536
    %v672 = vunpack.c.l.b16 %v537
    %v673 = vunpack.c.l.b16 %v538
    %v674 = vunpack.c.l.b16 %v539
    %v675 = vunpack.c.l.b16 %v540
    %v676 = vunpack.c.l.b16 %v541
    %v677 = vunpack.c.l.b16 %v542
    %v678 = vunpack.c.l.b16 %v543
    %v679 = vunpack.c.l.b16 %v544
    %v680 = vunpack.c.l.b16 %v545
    %v681 = vunpack.c.l.b16 %v546
    %v682 = vunpack.c.l.b16 %v547
    %v683 = vunpack.c.l.b16 %v548
    %v684 = vunpack.c.l.b16 %v549
    %v685 = vunpack.c.l.b16 %v550
    %v686 = vpack.c.b16 %v623, %v622
    %v687 = vpack.c.b16 %v625, %v624
    %v688 = vpack.c.b16 %v627, %v626
    %v689 = vpack.c.b16 %v629, %v628
    %v690 = vpack.c.b16 %v631, %v630
    %v691 = vpack.c.b16 %v633, %v632
    %v692 = vpack.c.b16 %v635, %v634
    %v693 = vpack.c.b16 %v637, %v636
    %v694 = vpack.c.b16 %v639, %v638
    %v695 = vpack.c.b16 %v641, %v640
    %v696 = vpack.c.b16 %v643, %v642
    %v697 = vpack.c.b16 %v645, %v644
    %v698 = vpack.c.b16 %v647, %v646
    %v699 = vpack.c.b16 %v649, %v648
    %v700 = vpack.c.b16 %v651, %v650
    %v701 = vpack.c.b16 %v653, %v652
    %v702 = vpack.c.b16 %v655, %v654
    %v703 = vpack.c.b16 %v657, %v656
    %v704 = vpack.c.b16 %v659, %v658
    %v705 = vpack.c.b16 %v661, %v660
    %v706 = vpack.c.b16 %v663, %v662
    %v707 = vpack.c.b16 %v665, %v664
    %v708 = vpack.c.b16 %v667, %v666
    %v709 = vpack.c.b16 %v669, %v668
    %v710 = vpack.c.b16 %v671, %v670
    %v711 = vpack.c.b16 %v673, %v672
    %v712 = vpack.c.b16 %v675, %v674
    %v713 = vpack.c.b16 %v677, %v676
    %v714 = vpack.c.b16 %v679, %v678
    %v715 = vpack.c.b16 %v681, %v680
    %v716 = vpack.c.b16 %v683, %v682
    %v717 = vpack.c.b16 %v685, %v684
    %750 = vmatprep.subr.bf16.mxu0 0
    %751 = vmatpush1.bf16.msra.mxu0 %v686
    %752 = vmatprep.subr.bf16.mxu0 0
    %753 = vmatpush1.bf16.msra.mxu0 %v687
    %754 = vmatprep.subr.bf16.mxu0 0
    %755 = vmatpush1.bf16.msra.mxu0 %v688
    %756 = vmatprep.subr.bf16.mxu0 0
    %757 = vmatpush1.bf16.msra.mxu0 %v689
    %758 = vmatprep.subr.bf16.mxu0 0
    %759 = vmatpush1.bf16.msra.mxu0 %v690
    %760 = vmatprep.subr.bf16.mxu0 0
    %761 = vmatpush1.bf16.msra.mxu0 %v691
    %762 = vmatprep.subr.bf16.mxu0 0
    %763 = vmatpush1.bf16.msra.mxu0 %v692
    %764 = vmatprep.subr.bf16.mxu0 0
    %765 = vmatpush1.bf16.msra.mxu0 %v693
    %766 = vmatprep.subr.bf16.mxu0 0
    %767 = vmatpush1.bf16.msra.mxu0 %v694
    %768 = vmatprep.subr.bf16.mxu0 0
    %769 = vmatpush1.bf16.msra.mxu0 %v695
    %770 = vmatprep.subr.bf16.mxu0 0
    %771 = vmatpush1.bf16.msra.mxu0 %v696
    %772 = vmatprep.subr.bf16.mxu0 0
    %773 = vmatpush1.bf16.msra.mxu0 %v697
    %774 = vmatprep.subr.bf16.mxu0 0
    %775 = vmatpush1.bf16.msra.mxu0 %v698
    %776 = vmatprep.subr.bf16.mxu0 0
    %777 = vmatpush1.bf16.msra.mxu0 %v699
    %778 = vmatprep.subr.bf16.mxu0 0
    %779 = vmatpush1.bf16.msra.mxu0 %v700
    %780 = vmatprep.subr.bf16.mxu0 0
    %781 = vmatpush1.bf16.msra.mxu0 %v701
    %782 = vmatprep.mubr.bf16.mxu0 %v480
    %783 = vmatmul.mubr.bf16.gmra.mrb[0].mxu0 %v479
    %v784 = vpop.f32.mrb[0].mxu0
    %v785 = vadd.f32 %v556, %v784
    %v786 = vpop.f32.mrb[0].mxu0
    %v787 = vpop.f32.mrb[0].mxu0
    %v788 = vadd.f32 %v556, %v787
    %v789 = vpop.f32.mrb[0].mxu0
    %790 = vmatprep.mubr.bf16.mxu0 %v484
    %791 = vmatmul.mubr.bf16.gmra.mrb[0].mxu0 %v483
    %v792 = vpop.f32.mrb[0].mxu0
    %v793 = vadd.f32 %v556, %v792
    %v794 = vpop.f32.mrb[0].mxu0
    %v795 = vpop.f32.mrb[0].mxu0
    %v796 = vadd.f32 %v556, %v795
    %v797 = vpop.f32.mrb[0].mxu0
    %798 = vdwg.mxu0
    %799 = vmatprep.subr.bf16.mxu0 0
    %800 = vmatpush1.bf16.msra.mxu0 %v702
    %801 = vmatprep.subr.bf16.mxu0 0
    %802 = vmatpush1.bf16.msra.mxu0 %v703
    %803 = vmatprep.subr.bf16.mxu0 0
    %804 = vmatpush1.bf16.msra.mxu0 %v704
    %805 = vmatprep.subr.bf16.mxu0 0
    %806 = vmatpush1.bf16.msra.mxu0 %v705
    %807 = vmatprep.subr.bf16.mxu0 0
    %808 = vmatpush1.bf16.msra.mxu0 %v706
    %809 = vmatprep.subr.bf16.mxu0 0
    %810 = vmatpush1.bf16.msra.mxu0 %v707
    %811 = vmatprep.subr.bf16.mxu0 0
    %812 = vmatpush1.bf16.msra.mxu0 %v708
    %813 = vmatprep.subr.bf16.mxu0 0
    %814 = vmatpush1.bf16.msra.mxu0 %v709
    %815 = vmatprep.subr.bf16.mxu0 0
    %816 = vmatpush1.bf16.msra.mxu0 %v710
    %817 = vmatprep.subr.bf16.mxu0 0
    %818 = vmatpush1.bf16.msra.mxu0 %v711
    %819 = vmatprep.subr.bf16.mxu0 0
    %820 = vmatpush1.bf16.msra.mxu0 %v712
    %821 = vmatprep.subr.bf16.mxu0 0
    %822 = vmatpush1.bf16.msra.mxu0 %v713
    %823 = vmatprep.subr.bf16.mxu0 0
    %824 = vmatpush1.bf16.msra.mxu0 %v714
    %825 = vmatprep.subr.bf16.mxu0 0
    %826 = vmatpush1.bf16.msra.mxu0 %v715
    %827 = vmatprep.subr.bf16.mxu0 0
    %828 = vmatpush1.bf16.msra.mxu0 %v716
    %829 = vmatprep.subr.bf16.mxu0 0
    %830 = vmatpush1.bf16.msra.mxu0 %v717
    %831 = vmatprep.mubr.bf16.mxu0 %v482
    %832 = vmatmul.mubr.bf16.gmra.mrb[0].mxu0 %v481
    %v833 = vpop.f32.mrb[0].mxu0
    %v834 = vadd.f32 %v785, %v833
    %v835 = vpop.f32.mrb[0].mxu0
    %v836 = vpop.f32.mrb[0].mxu0
    %v837 = vadd.f32 %v788, %v836
    %v838 = vpop.f32.mrb[0].mxu0
    %839 = vmatprep.mubr.bf16.mxu0 %v486
    %840 = vmatmul.mubr.bf16.gmra.mrb[0].mxu0 %v485
    %v841 = vpop.f32.mrb[0].mxu0
    %v842 = vadd.f32 %v793, %v841
    %v843 = vpop.f32.mrb[0].mxu0
    %v844 = vpop.f32.mrb[0].mxu0
    %v845 = vadd.f32 %v796, %v844
    %v846 = vpop.f32.mrb[0].mxu0
    %847 = vdwg.mxu0
    %848 = vst [vmem:[#allocation8] sm:$0xff] %v834
    %849 = vst [vmem:[#allocation8 + $0x8] sm:$0xff] %v837
    %850 = vst [vmem:[#allocation8 + $0x10] sm:$0xff] %v842
    %851 = vst [vmem:[#allocation8 + $0x18] sm:$0xff] %v845
    // Predicated region
    $region34: #{tpu_custom_call.1} parent=1 // pred_check
      _
    $region35: #{tpu_custom_call.1} parent=1 // pred_check_branch
      %853 = sbr.rel (0) target = $region37
    $region36: #{tpu_custom_call.1} parent=1 // pred_region
      %s855 = ssub.s32 512, 512
      %856 = vsyncadd [#allocation4], %s855
      %s857 = sshll.u32 [#allocation8], 4
      %s858 = int_to_ptr.vmem [resolvable:$true] %s857
      %863 = dma.vmem_to_hbm [thread:$0]  %s858, 512, %s5, [#allocation4], 128, 128, 8
    $region37: #{tpu_custom_call.1} parent=1 // pred_fallthru
      _
    // Predicated region
    $region38: #{tpu_custom_call.1} parent=1 // pred_check
      _
    $region39: #{tpu_custom_call.1} parent=1 // pred_check_branch
      %865 = sbr.rel (0) target = $region41
    $region40: #{tpu_custom_call.1} parent=1 // pred_region
      %866 = dma.done [#allocation4], 512
    $region41: #{tpu_custom_call.1} parent=1 // pred_fallthru
      _
    %867 = vsyncpa [#allocation3], 1
    %868 = vsyncpa [#allocation6], 1
    %869 = vsyncpa [#allocation4], 1

</llo_original>
